<compile_context>
chip_gen: v7x
topology: tpu7x:2x2x1
jax: 0.10.0
libtpu: 0.0.40
codegen_flags: <defaults>
</compile_context>

<pallas_src>
import functools

import jax
import jax.numpy as jnp
from jax.experimental import pallas as pl
from jax.experimental.pallas import tpu as pltpu

_MIB = 1024 * 1024


def _rmsnorm_pre_kernel(x_ref, o_ref, *, eps, inv_d):
    # First read: f32 sum of squares over the feature (lane) axis.
    x = x_ref[...].astype(jnp.float32)
    ms = jnp.sum(x * x, axis=-1, keepdims=True) * inv_d
    # rsqrt lowers to the EUP (free slot); remaining work is one broadcast mul.
    inv_scale = jax.lax.rsqrt(ms + eps)
    # Second read of the VMEM block for the scale-and-store: avoids keeping the
    # full f32 upcast live across the reduction (vld bandwidth is far above
    # what this mem-bound kernel needs, and VMEM/vreg pressure drops).
    o_ref[...] = (x_ref[...].astype(jnp.float32) * inv_scale).astype(o_ref.dtype)


def _vmem_budgets():
    """Per-generation budgets: v7x has 64 MiB VMEM/TC vs 128 MiB on v5e/v6e."""
    vmem_cap = 128 * _MIB
    try:
        cap = getattr(pltpu.get_tpu_info(), "vmem_capacity_bytes", None)
        if cap:
            vmem_cap = int(cap)
    except Exception:
        pass
    # Budget for double-buffered in+out blocks + f32 intermediates.
    block_budget = min((vmem_cap * 2) // 5, 32 * _MIB)  # ~25.6 MiB v7x, 32 MiB else
    # Hard cap on the scoped-VMEM limit we declare (leave compiler headroom).
    limit_cap = min((vmem_cap * 3) // 4, 64 * _MIB)      # 48 MiB v7x, 64 MiB else
    return block_budget, limit_cap


def _round_up(v, m):
    return ((v + m - 1) // m) * m


def _pick_tile_rows(rows, d, in_bytes, out_bytes, block_budget_bytes):
    """Byte-based tile sizing (no fixed row cap).

    Double-buffered in+out blocks plus ~2 f32 temporaries of the tile must fit
    the budget; tall tiles for small d_model keep each grid step in the
    multi-MiB range so the per-step overhead stays negligible.
    """
    per_row = 2 * d * (in_bytes + out_bytes) + 2 * d * 4   # blocks + f32 temps
    tr = block_budget_bytes // max(per_row, 1)
    tr = max(8, (tr // 8) * 8)                             # sublane-aligned
    # Never taller than the (8-rounded) row count.
    tr = min(tr, max(8, _round_up(rows, 8)))
    # Guarantee >= 2 balanced grid steps so the "parallel" row axis can shard
    # across both TensorCores on v7x (cost on single-TC v5e/v6e: ~0.35 us).
    half_rows = max(8, _round_up(pl.cdiv(rows, 2), 8))
    tr = min(tr, half_rows)
    return tr


def rmsnorm_pre(x, eps=1e-5, out_dtype=None, tile_rows=None):
    """RMSNormPre forward. x: [batch, pos, d_model]."""
    b, p, d = x.shape
    rows = b * p
    x2d = x.reshape(rows, d)

    if out_dtype is None:
        # cfg.dtype in the module; default to the input dtype (bf16 model ->
        # bf16 output, halving write traffic; reduction stays in f32).
        out_dtype = x.dtype

    in_bytes = jnp.dtype(x.dtype).itemsize
    out_bytes = jnp.dtype(out_dtype).itemsize
    block_budget, limit_cap = _vmem_budgets()
    if tile_rows is None:
        tile_rows = _pick_tile_rows(rows, d, in_bytes, out_bytes, block_budget)

    grid_steps = pl.cdiv(rows, tile_rows)
    grid = (grid_steps,)

    # Scoped-VMEM limit sized from the actual double-buffered block footprint
    # plus the f32 compute intermediates, capped per generation.
    in_block_bytes = tile_rows * d * in_bytes
    block_bytes = 2 * tile_rows * d * (in_bytes + out_bytes)   # double-buffered
    interm_bytes = 2 * tile_rows * d * 4                        # f32 temporaries
    vmem_limit = int(min(max(block_bytes + interm_bytes + 4 * _MIB, 16 * _MIB),
                         limit_cap))

    in_spec = pl.BlockSpec((tile_rows, d), lambda i: (i, 0))
    if in_block_bytes < 2 * _MIB and grid_steps >= 3:
        # Small per-step blocks can expose DMA issue latency; go 3-deep on the
        # input pipeline (one extra small VMEM buffer).
        try:
            in_spec = pl.BlockSpec((tile_rows, d), lambda i: (i, 0),
                                   pipeline_mode=pl.Buffered(3))
        except TypeError:
            pass  # older BlockSpec without pipeline_mode; keep default depth

    cost = pl.CostEstimate(
        flops=3 * rows * d,
        transcendentals=rows,
        bytes_accessed=rows * d * (in_bytes + out_bytes),
    )

    out2d = pl.pallas_call(
        functools.partial(_rmsnorm_pre_kernel, eps=float(eps), inv_d=1.0 / d),
        out_shape=jax.ShapeDtypeStruct((rows, d), out_dtype),
        grid_spec=pl.GridSpec(
            grid=grid,
            in_specs=[in_spec],
            out_specs=pl.BlockSpec((tile_rows, d), lambda i: (i, 0)),
        ),
        compiler_params=pltpu.CompilerParams(
            dimension_semantics=("parallel",),
            vmem_limit_bytes=vmem_limit,
        ),
        cost_estimate=cost,
    )(x2d)

    return out2d.reshape(b, p, d)


def _ref_rmsnorm(x, eps, out_dtype):
    xf = x.astype(jnp.float32)
    scale = jnp.sqrt(jnp.mean(xf * xf, axis=-1, keepdims=True) + eps)
    return (xf / scale).astype(out_dtype)


if __name__ == "__main__":
    # TODO(synk): hook_scale / hook_normalized HookPoints are identity
    # pass-throughs at inference and are not represented in the kernel.
    eps = 1e-5

    # 1) Small shape consistent with the module: batch=2, pos=8, d_model=32.
    key = jax.random.PRNGKey(0)
    batch, pos, d_model = 2, 8, 32
    x = jax.random.normal(key, (batch, pos, d_model), dtype=jnp.float32)
    out = jax.block_until_ready(rmsnorm_pre(x, eps=eps, out_dtype=jnp.float32))
    ref = _ref_rmsnorm(x, eps, jnp.float32)
    assert out.shape == (batch, pos, d_model)
    assert jnp.allclose(out, ref, atol=1e-5, rtol=1e-5), "mismatch vs reference"

    # 2) Ragged grid + bf16 output path (rows not a multiple of the tile,
    #    output narrower than input).
    k1, k2 = jax.random.split(jax.random.PRNGKey(0))
    x2 = jax.random.normal(k1, (3, 37, 256), dtype=jnp.float32)
    out2 = jax.block_until_ready(rmsnorm_pre(x2, eps=eps, out_dtype=jnp.bfloat16))
    ref2 = _ref_rmsnorm(x2, eps, jnp.bfloat16)
    assert out2.shape == x2.shape
    assert jnp.allclose(out2.astype(jnp.float32), ref2.astype(jnp.float32),
                        atol=2e-2, rtol=2e-2), "bf16 mismatch vs reference"

    # 3) Deep-grid / small-block path (explicit tile_rows) to exercise the
    #    Buffered(3) input pipeline.
    x3 = jax.random.normal(k2, (2, 64, 128), dtype=jnp.float32)
    out3 = jax.block_until_ready(
        rmsnorm_pre(x3, eps=eps, out_dtype=jnp.float32, tile_rows=32))
    ref3 = _ref_rmsnorm(x3, eps, jnp.float32)
    assert out3.shape == x3.shape
    assert jnp.allclose(out3, ref3, atol=1e-5, rtol=1e-5), "deep-grid mismatch"

    print("KERNEL_OK")
</pallas_src>

<mosaic_0001>
module attributes {stable_mosaic.version = 11 : i64} {
  func.func @_rmsnorm_pre_kernel(%arg0: i32, %arg1: memref<8x32xf32, #tpu.memory_space<vmem>>, %arg2: memref<8x32xf32, #tpu.memory_space<vmem>>) attributes {dimension_semantics = [#tpu.dimension_semantics<parallel>], iteration_bounds = array<i64: 2>, scalar_prefetch = 0 : i64, scratch_operands = 0 : i64, tpu.core_type = #tpu.core_type<tc>, window_params = [{transform_indices = @transform_0, window_bounds = array<i64: 8, 32>}, {transform_indices = @transform_1, window_bounds = array<i64: 8, 32>}]} {
    %c0 = arith.constant 0 : index
    %c0_0 = arith.constant 0 : index
    %0 = vector.load %arg1[%c0, %c0_0] : memref<8x32xf32, #tpu.memory_space<vmem>>, vector<8x32xf32>
    %1 = arith.mulf %0, %0 : vector<8x32xf32>
    %cst = arith.constant dense<0.000000e+00> : vector<8xf32>
    %2 = vector.multi_reduction <add>, %1, %cst [1] : vector<8x32xf32> to vector<8xf32>
    %3 = vector.shape_cast %2 : vector<8xf32> to vector<8x1xf32>
    %cst_1 = arith.constant 3.125000e-02 : f32
    %4 = vector.broadcast %cst_1 : f32 to vector<8x1xf32>
    %5 = arith.mulf %3, %4 : vector<8x1xf32>
    %cst_2 = arith.constant 9.99999974E-6 : f32
    %6 = vector.broadcast %cst_2 : f32 to vector<8x1xf32>
    %7 = arith.addf %5, %6 : vector<8x1xf32>
    %8 = math.rsqrt %7 : vector<8x1xf32>
    %c0_3 = arith.constant 0 : index
    %c0_4 = arith.constant 0 : index
    %9 = vector.load %arg1[%c0_3, %c0_4] : memref<8x32xf32, #tpu.memory_space<vmem>>, vector<8x32xf32>
    %10 = vector.broadcast %8 : vector<8x1xf32> to vector<8x32xf32>
    %11 = arith.mulf %9, %10 : vector<8x32xf32>
    %c0_5 = arith.constant 0 : index
    %c0_6 = arith.constant 0 : index
    %12 = vector.load %arg2[%c0_5, %c0_6] : memref<8x32xf32, #tpu.memory_space<vmem>>, vector<8x32xf32>
    tpu.vector_store %arg2[%c0_5, %c0_6], %11 {strides = array<i32>} : memref<8x32xf32, #tpu.memory_space<vmem>>, vector<8x32xf32>,
    return
  }
  func.func @transform_0(%arg0: i32) -> (i32, i32) {
    %c0_i32 = arith.constant 0 : i32
    %c0_i32_0 = arith.constant 0 : i32
    return %arg0, %c0_i32 : i32, i32
  }
  func.func @transform_1(%arg0: i32) -> (i32, i32) {
    %c0_i32 = arith.constant 0 : i32
    %c0_i32_0 = arith.constant 0 : i32
    return %arg0, %c0_i32 : i32, i32
  }
}

</mosaic_0001>

<llo_original>
// kernel: tpu_custom_call.1
$region0: #{tpu_custom_call.1}
  #allocation0 [shape = 'u32[]', space=smem, size = 0x4, offset = 0x4, fixed_abs, tag = 'smem constant byte address 0x4 - core index']
  #allocation1 [shape = 'u32[144,128]{1,0:T(1,128)}', space=vmem, size = 0x12000, scoped, tag = 'internal scratch']
  %s0 = inlined_call_operand.hbm [shape: f32[16,32], index: 0, kind: input, shape index: {}]
  %s1 = inlined_call_operand.hbm [shape: f32[16,32], index: 1, kind: output, shape index: {}]
  %s2 = sld [smem:[#allocation0]]
  $region41: #{tpu_custom_call.1} parent=0
    _
  %s4 = ssub.s32 1, %s2
  %s5 = scalar_select 0, %s4, %s2
  $region1: #{tpu_custom_call.1} parent=0
    #allocation2 [shape = 'u8[8192]{0}', space=vmem, size = 0x2000, scoped, tag = 'input window, operand 0']
    #allocation3 [shape = 's32[2]{0}', space=sflag, size = 0x8, scoped, tag = 'scoped memory for tpu_custom_call.1']
    #allocation4 [shape = 's32[2]{0}', space=sflag, size = 0x8, scoped, tag = 'scoped memory for tpu_custom_call.1']
    #allocation5 [shape = 'u8[8192]{0}', space=vmem, size = 0x2000, scoped, tag = 'output window, operand 0']
    %6 = vsyncpa [#allocation3], 0
    %s7 = scalar_lea.sflag [#allocation3], 1
    %8 = vsyncpa %s7, 0
    %9 = vsyncpa [#allocation4], 0
    %s10 = scalar_lea.sflag [#allocation4], 1
    %11 = vsyncpa %s10, 0
    loop: start=0, step=1, limit=4
    $region2: #{tpu_custom_call.1} parent=1 // loop_pre_header
      _
    $region3: #{tpu_custom_call.1} parent=1 // loop_header
      %s13 = sphi 0, %s17
      %p14 = scmp.ge.s32.totalorder %s13, 4
      %s23 = sphi 0, %s25
      %s26 = sphi 0, %s23
      %s27 = sphi 0, %s26
      %s43 = sphi 0, %s27
      %s49 = sphi 0, %s51
      %s52 = sphi 0, %s49
      %s53 = sphi 0, %s52
      %s69 = sphi 0, %s53
    $region4: #{tpu_custom_call.1} parent=1 // loop_header_branch
      %16 = sbr.rel (%p14) target = $region8
    $region5: #{tpu_custom_call.1} parent=1 // loop_body
      %s18 = ssub.s32 %s13, 1
      %s19 = ssub.s32 %s13, 2
      %s20 = sadd.s32 %s13, 1
      %s21 = ssub.s32 %s13, %s20
      %p22 = scmp.eq.s32.totalorder %s21, 0
      %s24 = sadd.s32 %s23, 1
      %s25 = scalar_select %p22, %s23, %s24
      %p28 = pneg %p22
      %p29 = scmp.eq.s32.totalorder %s13, 1
      %p30 = por %p28, %p29
      %p31 = scmp.ne.s32.totalorder %s23, %s26
      %p32 = scmp.eq.s32.totalorder %s13, 0
      %p33 = por %p31, %p32
      %p34 = scmp.ne.s32.totalorder %s23, %s26
      %p35 = scmp.eq.s32.totalorder %s18, 1
      %p36 = por %p34, %p35
      %p37 = scmp.ne.s32.totalorder %s26, %s27
      %p38 = scmp.eq.s32.totalorder %s18, 0
      %p39 = por %p37, %p38
      %p40 = scmp.ne.s32.totalorder %s26, %s27
      %p41 = scmp.eq.s32.totalorder %s19, 1
      %p42 = por %p40, %p41
      %p44 = scmp.ne.s32.totalorder %s27, %s43
      %p45 = scmp.eq.s32.totalorder %s19, 0
      %p46 = por %p44, %p45
      %s47 = ssub.s32 %s13, %s20
      %p48 = scmp.eq.s32.totalorder %s47, 0
      %s50 = sadd.s32 %s49, 1
      %s51 = scalar_select %p48, %s49, %s50
      %p54 = pneg %p48
      %p55 = scmp.eq.s32.totalorder %s13, 1
      %p56 = por %p54, %p55
      %p57 = scmp.ne.s32.totalorder %s49, %s52
      %p58 = scmp.eq.s32.totalorder %s13, 0
      %p59 = por %p57, %p58
      %p60 = scmp.ne.s32.totalorder %s49, %s52
      %p61 = scmp.eq.s32.totalorder %s18, 1
      %p62 = por %p60, %p61
      %p63 = scmp.ne.s32.totalorder %s52, %s53
      %p64 = scmp.eq.s32.totalorder %s18, 0
      %p65 = por %p63, %p64
      %p66 = scmp.ne.s32.totalorder %s52, %s53
      %p67 = scmp.eq.s32.totalorder %s19, 1
      %p68 = por %p66, %p67
      %p70 = scmp.ne.s32.totalorder %s53, %s69
      %p71 = scmp.eq.s32.totalorder %s19, 0
      %p72 = por %p70, %p71
      %p73 = scmp.le.s32.totalorder 1, %s13
      %p74 = scmp.lt.s32.totalorder %s13, 3
      %p75 = pnand %p73, %p74
      %p76 = pneg %p75
      // Predicated region
      $region9: #{tpu_custom_call.1} parent=5 // pred_check
        _
      $region10: #{tpu_custom_call.1} parent=5 // pred_check_branch
        %78 = sbr.rel (%p75) target = $region12
      $region11: #{tpu_custom_call.1} parent=5 // pred_region
        %s79 = ssub.s32 %s13, 1
      $region12: #{tpu_custom_call.1} parent=5 // pred_fallthru
        _
      %p80 = scmp.lt.s32.totalorder %s13, 2
      // Predicated region
      $region13: #{tpu_custom_call.1} parent=5 // pred_check
        %p81 = pneg %p80
      $region14: #{tpu_custom_call.1} parent=5 // pred_check_branch
        %83 = sbr.rel (%p81) target = $region16
      $region15: #{tpu_custom_call.1} parent=5 // pred_region
        // Predicated region
        $region17: #{tpu_custom_call.1} parent=15 // pred_check
          %p84 = pneg %p33
        $region18: #{tpu_custom_call.1} parent=15 // pred_check_branch
          %86 = sbr.rel (%p84) target = $region20
        $region19: #{tpu_custom_call.1} parent=15 // pred_region
          %s87 = sand.u32 %s23, 1
          %s88 = scalar_lea.sflag [#allocation3], %s87
          %s89 = sand.u32 %s23, 1
          %s90 = smul.addr %s89, 8
          %s91 = scalar_lea.vmem [#allocation2], %s90
          %s93 = ssub.s32 128, 128
          %94 = vsyncadd %s88, %s93
          %s95 = smul.addr %s13, 128
          %s96 = scalar_lea.hbm %s0, %s95
          %s98 = sshll.u32 %s91, 4
          %s99 = int_to_ptr.vmem [resolvable:$true] %s98
          %101 = dma.hbm_to_vmem [thread:$0]  %s96, 128, %s99, %s88
        $region20: #{tpu_custom_call.1} parent=15 // pred_fallthru
          _
      $region16: #{tpu_custom_call.1} parent=5 // pred_fallthru
        _
      %p102 = scmp.le.s32.totalorder 1, %s13
      %p103 = scmp.lt.s32.totalorder %s13, 3
      %p104 = pnand %p102, %p103
      %p105 = pneg %p104
      // Predicated region
      $region21: #{tpu_custom_call.1} parent=5 // pred_check
        _
      $region22: #{tpu_custom_call.1} parent=5 // pred_check_branch
        %107 = sbr.rel (%p104) target = $region24
      $region23: #{tpu_custom_call.1} parent=5 // pred_region
        %s108 = ssub.s32 %s13, 1
        %s109 = sand.u32 %s26, 1
        %s110 = scalar_lea.sflag [#allocation3], %s109
        %s111 = sand.u32 %s26, 1
        %s112 = smul.addr %s111, 8
        %s113 = scalar_lea.vmem [#allocation2], %s112
        // Predicated region
        $region25: #{tpu_custom_call.1} parent=23 // pred_check
          %p114 = pneg %p39
        $region26: #{tpu_custom_call.1} parent=23 // pred_check_branch
          %116 = sbr.rel (%p114) target = $region28
        $region27: #{tpu_custom_call.1} parent=23 // pred_region
          %117 = dma.done %s110, 128
        $region28: #{tpu_custom_call.1} parent=23 // pred_fallthru
          _
        %s118 = sand.u32 %s26, 1
        %s119 = scalar_lea.sflag [#allocation3], %s118
        %s120 = sand.u32 %s26, 1
        %s121 = smul.addr %s120, 8
        %s122 = scalar_lea.vmem [#allocation2], %s121
        %p123 = pneg %p39
        %p124 = pneg %p36
        %p125 = pneg %p65
        %p126 = pneg %p62
        %s127 = sand.u32 %s52, 1
        %s128 = scalar_lea.sflag [#allocation4], %s127
        %s129 = sand.u32 %s52, 1
        %s130 = smul.addr %s129, 8
        %s131 = scalar_lea.vmem [#allocation5], %s130
        %v132 = vld [vmem:[%s113] sm:$0xff]
        %v133 = vmul.f32 %v132, %v132
        %vm134 = vcmask 261120
        %v135 = vsel %vm134, %v133, 0.0
        %136 = vadd.xlane.f32.xlu0 %v135
        %v137 = vpop.xlane.xlu0 %136
        %v138 = vmul.f32 %v137, 0.03125
        %v139 = vadd.f32 %v138, 1e-05
        %v140 = vrsqrt.pop %v139
        %v141 = vmul.f32 %v132, %v140
        %142 = vst.msk [vmem:[%s131] sm:$0xff] %vm134, %v141
        %s143 = sand.u32 %s52, 1
        %s144 = scalar_lea.sflag [#allocation4], %s143
        %s145 = sand.u32 %s52, 1
        %s146 = smul.addr %s145, 8
        %s147 = scalar_lea.vmem [#allocation5], %s146
        // Predicated region
        $region29: #{tpu_custom_call.1} parent=23 // pred_check
          %p148 = pneg %p62
        $region30: #{tpu_custom_call.1} parent=23 // pred_check_branch
          %150 = sbr.rel (%p148) target = $region32
        $region31: #{tpu_custom_call.1} parent=23 // pred_region
          %s152 = ssub.s32 128, 128
          %153 = vsyncadd %s144, %s152
          %s154 = smul.addr %s18, 128
          %s155 = scalar_lea.hbm %s1, %s154
          %s157 = sshll.u32 %s147, 4
          %s158 = int_to_ptr.vmem [resolvable:$true] %s157
          %160 = dma.vmem_to_hbm [thread:$0]  %s158, 128, %s155, %s144
        $region32: #{tpu_custom_call.1} parent=23 // pred_fallthru
          _
      $region24: #{tpu_custom_call.1} parent=5 // pred_fallthru
        _
      %p161 = scmp.le.s32.totalorder 2, %s13
      // Predicated region
      $region33: #{tpu_custom_call.1} parent=5 // pred_check
        %p162 = pneg %p161
      $region34: #{tpu_custom_call.1} parent=5 // pred_check_branch
        %164 = sbr.rel (%p162) target = $region36
      $region35: #{tpu_custom_call.1} parent=5 // pred_region
        %s165 = ssub.s32 %s13, 2
        // Predicated region
        $region37: #{tpu_custom_call.1} parent=35 // pred_check
          %p166 = pneg %p68
        $region38: #{tpu_custom_call.1} parent=35 // pred_check_branch
          %168 = sbr.rel (%p166) target = $region40
        $region39: #{tpu_custom_call.1} parent=35 // pred_region
          %s169 = sand.u32 %s53, 1
          %s170 = scalar_lea.sflag [#allocation4], %s169
          %s171 = sand.u32 %s53, 1
          %s172 = smul.addr %s171, 8
          %s173 = scalar_lea.vmem [#allocation5], %s172
          %174 = dma.done %s170, 128
        $region40: #{tpu_custom_call.1} parent=35 // pred_fallthru
          _
      $region36: #{tpu_custom_call.1} parent=5 // pred_fallthru
        _
    $region6: #{tpu_custom_call.1} parent=1 // loop_footer
      %s17 = sadd.s32 1, %s13
    $region7: #{tpu_custom_call.1} parent=1 // loop_footer_branch
      %12 = sbr.rel target = $region3
    $region8: #{tpu_custom_call.1} parent=1 // loop_exit
      _
    %175 = vsyncpa [#allocation3], 1
    %s176 = scalar_lea.sflag [#allocation3], 1
    %177 = vsyncpa %s176, 1
    %178 = vsyncpa [#allocation4], 1
    %s179 = scalar_lea.sflag [#allocation4], 1
    %180 = vsyncpa %s179, 1

</llo_original>
